<compile_context>
chip_gen: v6e
topology: v6e:2x2x1
jax: 0.10.0
libtpu: 0.0.40
codegen_flags: <defaults>
</compile_context>

<pallas_src>
import jax
import jax.numpy as jnp
from jax.experimental import pallas as pl
from jax.experimental.pallas import tpu as pltpu

IN_FEATURES = 784
H1, H2 = 256, 128
H3_PAD = 128      # fc3 out 64 -> 128 (padded weight cols / bias are exactly 0)
LOGIT_PAD = 128   # fc4 out 10 -> 128 for a lane-dense MXU matmul
OUT_W = 16        # narrow f32 output block written to HBM (cols 10..15 padding)
NEG = -1e30       # padded-logit bias: exp underflows to 0 inside log_softmax


def mlp_brelu_kernel(x_ref, w1_ref, b1_ref, w2_ref, b2_ref,
                     w3_ref, b3_ref, w4_ref, b4_ref, out_ref):
    # Fused cast: x stays f32 in HBM, becomes bf16 only in VMEM.
    x = x_ref[...].astype(jnp.bfloat16)                    # (TILE_M, 784)

    # Row-parity mask hoisted once per tile; reused by all three BReLUs.
    # TILE_M is a multiple of 8, so local parity == global batch parity.
    row = jax.lax.broadcasted_iota(jnp.int32, (x.shape[0], 1), 0)
    even = (row & 1) == 0

    def brelu(h):                                          # f32 in / f32 out
        return jnp.where(even, jnp.maximum(h, 0.0), jnp.minimum(h, 0.0))

    def dot(a, w_ref):                                     # bf16 ops, f32 acc
        return jnp.dot(a.astype(jnp.bfloat16), w_ref[...],
                       preferred_element_type=jnp.float32)

    h1 = brelu(dot(x, w1_ref) + b1_ref[...])               # (TILE_M, 256)
    h2 = brelu(dot(h1, w2_ref) + b2_ref[...])              # (TILE_M, 128)
    h3 = brelu(dot(h2, w3_ref) + b3_ref[...])              # (TILE_M, 128)

    # Full-width MXU matmul, then keep only the first OUT_W logit columns
    # (cols 10..15 carry the -1e30 pad bias so log_softmax ignores them).
    logits = (dot(h3, w4_ref) + b4_ref[...])[:, :OUT_W]    # (TILE_M, 16) f32

    # Numerically-stable log_softmax along the feature axis.
    m = jnp.max(logits, axis=1, keepdims=True)
    z = logits - m
    lse = jnp.log(jnp.sum(jnp.exp(z), axis=1, keepdims=True))
    out_ref[...] = (z - lse).astype(out_ref.dtype)


def _round_up(a, b):
    return (a + b - 1) // b * b


def _cdiv(a, b):
    return (a + b - 1) // b


def _pad_to(x, shape, value=0.0):
    pads = [(0, t - s) for s, t in zip(x.shape, shape)]
    return jnp.pad(x, pads, constant_values=value)


def _choose_tile_m(n):
    """~512-row tiles, multiple of 8, and >=2 grid steps whenever n >= 16
    (so the 'parallel' batch axis shards across both v7x TensorCores)."""
    n8 = _round_up(max(n, 8), 8)
    if n8 < 16:
        return 8
    steps = max(2, _cdiv(n8, 512))
    return _round_up(_cdiv(n8, steps), 8)


def prepare_params(params):
    """One-time weight/bias prep (pad small layers lane-dense, cast to bf16).
    Cache the result and reuse it across forward calls."""
    w1, b1, w2, b2, w3, b3, w4, b4 = params
    w1_p = w1.astype(jnp.bfloat16)                          # (784, 256), no K pad
    w2_p = w2.astype(jnp.bfloat16)                          # (256, 128)
    w3_p = _pad_to(w3, (H2, H3_PAD)).astype(jnp.bfloat16)   # (128, 128), pad = 0
    b3_p = _pad_to(b3, (1, H3_PAD))                         # pad = 0
    w4_p = _pad_to(w4, (H3_PAD, LOGIT_PAD)).astype(jnp.bfloat16)  # pad = 0
    b4_p = _pad_to(b4, (1, LOGIT_PAD), value=NEG)           # mask padded logits
    return (w1_p, b1, w2_p, b2, w3_p, b3_p, w4_p, b4_p)


def classifier_brelu_forward(x_nchw, prepared_params, *, tile_m=None):
    """x_nchw: (N, C, H, W) with C*H*W == 784. Returns (N, 10) log-probs (f32)."""
    n = x_nchw.shape[0]
    x2d = x_nchw.reshape(n, -1).astype(jnp.float32)          # == x.view(N, -1)
    assert x2d.shape[1] == IN_FEATURES

    if tile_m is None:
        tile_m = _choose_tile_m(n)
    assert tile_m % 8 == 0, "tile_m must be a multiple of 8 (BReLU row parity)"
    n_pad = _round_up(n, tile_m)
    if n_pad != n:
        x2d = jnp.pad(x2d, ((0, n_pad - n), (0, 0)))         # batch-dim pad only

    w1_p, b1, w2_p, b2, w3_p, b3_p, w4_p, b4_p = prepared_params

    const = lambda i: (0, 0)                                  # weights VMEM-resident
    fn = pl.pallas_call(
        mlp_brelu_kernel,
        out_shape=jax.ShapeDtypeStruct((n_pad, OUT_W), jnp.float32),
        grid=(n_pad // tile_m,),
        in_specs=[
            # x tile: last block dim == full array dim (784), f32 in HBM.
            # TODO(synk): add pipeline_mode=pl.Buffered(3) here if a trace
            # shows the x DMA exposed at step boundaries.
            pl.BlockSpec((tile_m, IN_FEATURES), lambda i: (i, 0)),
            pl.BlockSpec((IN_FEATURES, H1), const),           # w1
            pl.BlockSpec((1, H1), const),                     # b1
            pl.BlockSpec((H1, H2), const),                    # w2
            pl.BlockSpec((1, H2), const),                     # b2
            pl.BlockSpec((H2, H3_PAD), const),                # w3
            pl.BlockSpec((1, H3_PAD), const),                 # b3
            pl.BlockSpec((H3_PAD, LOGIT_PAD), const),         # w4
            pl.BlockSpec((1, LOGIT_PAD), const),              # b4
        ],
        out_specs=pl.BlockSpec((tile_m, OUT_W), lambda i: (i, 0)),
        compiler_params=pltpu.CompilerParams(
            dimension_semantics=("parallel",)),
    )
    out = fn(x2d, w1_p, b1, w2_p, b2, w3_p, b3_p, w4_p, b4_p)
    return out[:n, :10]


def init_params(key):
    """PyTorch nn.Linear-style init: U(-1/sqrt(fan_in), 1/sqrt(fan_in)).
    Weights stored as (in_features, out_features) so x @ W == PyTorch x @ W.T."""
    sizes = [(784, 256), (256, 128), (128, 64), (64, 10)]
    params = []
    keys = jax.random.split(key, 2 * len(sizes))
    for i, (fin, fout) in enumerate(sizes):
        bound = 1.0 / jnp.sqrt(jnp.float32(fin))
        w = jax.random.uniform(keys[2 * i], (fin, fout), jnp.float32,
                               minval=-bound, maxval=bound)
        b = jax.random.uniform(keys[2 * i + 1], (1, fout), jnp.float32,
                               minval=-bound, maxval=bound)
        params.extend([w, b])
    return tuple(params)


def _brelu_ref(h):
    row = jax.lax.broadcasted_iota(jnp.int32, (h.shape[0], 1), 0)
    even = (row & 1) == 0
    return jnp.where(even, jnp.maximum(h, 0.0), jnp.minimum(h, 0.0))


def _reference_forward(x_nchw, params):
    """Pure-JAX reference (bf16 operands, f32 accumulation, like the kernel)."""
    n = x_nchw.shape[0]
    x = x_nchw.reshape(n, -1)
    (w1, b1, w2, b2, w3, b3, w4, b4) = params

    def dot(a, w):
        return jnp.dot(a.astype(jnp.bfloat16), w.astype(jnp.bfloat16),
                       preferred_element_type=jnp.float32)

    h = _brelu_ref(dot(x, w1) + b1)
    h = _brelu_ref(dot(h, w2) + b2)
    h = _brelu_ref(dot(h, w3) + b3)
    logits = dot(h, w4) + b4
    return jax.nn.log_softmax(logits, axis=1)


if __name__ == "__main__":
    key = jax.random.PRNGKey(0)
    k_x, k_p = jax.random.split(key)

    # Small deterministic input consistent with a flattened 28x28 image batch.
    x = jax.random.normal(k_x, (8, 1, 28, 28), dtype=jnp.float32)
    params = init_params(k_p)
    prepared = prepare_params(params)    # one-time weight prep (cached)

    out = jax.block_until_ready(classifier_brelu_forward(x, prepared))
    ref = jax.block_until_ready(_reference_forward(x, params))

    assert out.shape == (8, 10)
    assert bool(jnp.all(jnp.isfinite(out)))
    # bf16 operands -> looser tolerance than a pure-f32 comparison.
    assert jnp.allclose(out, ref, atol=2e-2, rtol=2e-2)

    print("KERNEL_OK")
</pallas_src>

<mosaic_0001>
module attributes {stable_mosaic.version = 11 : i64} {
  func.func @mlp_brelu_kernel(%arg0: i32, %arg1: memref<8x784xf32, #tpu.memory_space<vmem>>, %arg2: memref<784x256xbf16, #tpu.memory_space<vmem>>, %arg3: memref<1x256xf32, #tpu.memory_space<vmem>>, %arg4: memref<256x128xbf16, #tpu.memory_space<vmem>>, %arg5: memref<1x128xf32, #tpu.memory_space<vmem>>, %arg6: memref<128x128xbf16, #tpu.memory_space<vmem>>, %arg7: memref<1x128xf32, #tpu.memory_space<vmem>>, %arg8: memref<128x128xbf16, #tpu.memory_space<vmem>>, %arg9: memref<1x128xf32, #tpu.memory_space<vmem>>, %arg10: memref<8x16xf32, #tpu.memory_space<vmem>>) attributes {dimension_semantics = [#tpu.dimension_semantics<parallel>], iteration_bounds = array<i64: 1>, scalar_prefetch = 0 : i64, scratch_operands = 0 : i64, tpu.core_type = #tpu.core_type<tc>, window_params = [{transform_indices = @transform_0, window_bounds = array<i64: 8, 784>}, {pipeline_mode = #tpu.pipeline_mode<synchronous>, transform_indices = @transform_1, window_bounds = array<i64: 784, 256>}, {pipeline_mode = #tpu.pipeline_mode<synchronous>, transform_indices = @transform_2, window_bounds = array<i64: 1, 256>}, {pipeline_mode = #tpu.pipeline_mode<synchronous>, transform_indices = @transform_3, window_bounds = array<i64: 256, 128>}, {pipeline_mode = #tpu.pipeline_mode<synchronous>, transform_indices = @transform_4, window_bounds = array<i64: 1, 128>}, {pipeline_mode = #tpu.pipeline_mode<synchronous>, transform_indices = @transform_5, window_bounds = array<i64: 128, 128>}, {pipeline_mode = #tpu.pipeline_mode<synchronous>, transform_indices = @transform_6, window_bounds = array<i64: 1, 128>}, {pipeline_mode = #tpu.pipeline_mode<synchronous>, transform_indices = @transform_7, window_bounds = array<i64: 128, 128>}, {pipeline_mode = #tpu.pipeline_mode<synchronous>, transform_indices = @transform_8, window_bounds = array<i64: 1, 128>}, {transform_indices = @transform_9, window_bounds = array<i64: 8, 16>}]} {
    %c0 = arith.constant 0 : index
    %c0_0 = arith.constant 0 : index
    %0 = vector.load %arg1[%c0, %c0_0] : memref<8x784xf32, #tpu.memory_space<vmem>>, vector<8x784xf32>
    %1 = arith.truncf %0 : vector<8x784xf32> to vector<8x784xbf16>
    %2 = tpu.iota {dimensions = array<i32: 0>} : vector<8x1xi32>
    %c1_i32 = arith.constant 1 : i32
    %3 = vector.broadcast %c1_i32 : i32 to vector<8x1xi32>
    %4 = arith.andi %2, %3 : vector<8x1xi32>
    %c0_i32 = arith.constant 0 : i32
    %5 = vector.broadcast %c0_i32 : i32 to vector<8x1xi32>
    %6 = arith.cmpi eq, %4, %5 : vector<8x1xi32>
    %c0_1 = arith.constant 0 : index
    %c0_2 = arith.constant 0 : index
    %7 = vector.load %arg2[%c0_1, %c0_2] : memref<784x256xbf16, #tpu.memory_space<vmem>>, vector<784x256xbf16>
    %cst = arith.constant dense<0.000000e+00> : vector<8x256xf32>
    %8 = tpu.matmul %1, %7, %cst {dimension_numbers = #tpu.dot_dimension_numbers<[1], [0], [0], [1], [0, 0, 1, 1], [], []>} : vector<8x784xbf16>, vector<784x256xbf16>, vector<8x256xf32> -> vector<8x256xf32>
    %c0_3 = arith.constant 0 : index
    %c0_4 = arith.constant 0 : index
    %9 = vector.load %arg3[%c0_3, %c0_4] : memref<1x256xf32, #tpu.memory_space<vmem>>, vector<1x256xf32>
    %10 = vector.broadcast %9 : vector<1x256xf32> to vector<8x256xf32>
    %11 = arith.addf %8, %10 : vector<8x256xf32>
    %cst_5 = arith.constant 0.000000e+00 : f32
    %12 = vector.broadcast %cst_5 : f32 to vector<8x256xf32>
    %13 = arith.maximumf %11, %12 : vector<8x256xf32>
    %cst_6 = arith.constant 0.000000e+00 : f32
    %14 = vector.broadcast %cst_6 : f32 to vector<8x256xf32>
    %15 = arith.minimumf %11, %14 : vector<8x256xf32>
    %16 = vector.shape_cast %6 : vector<8x1xi1> to vector<8x1xi1>
    %17 = vector.broadcast %16 : vector<8x1xi1> to vector<8x256xi1>
    %18 = arith.select %17, %13, %15 : vector<8x256xi1>, vector<8x256xf32>
    %19 = arith.truncf %18 : vector<8x256xf32> to vector<8x256xbf16>
    %c0_7 = arith.constant 0 : index
    %c0_8 = arith.constant 0 : index
    %20 = vector.load %arg4[%c0_7, %c0_8] : memref<256x128xbf16, #tpu.memory_space<vmem>>, vector<256x128xbf16>
    %cst_9 = arith.constant dense<0.000000e+00> : vector<8x128xf32>
    %21 = tpu.matmul %19, %20, %cst_9 {dimension_numbers = #tpu.dot_dimension_numbers<[1], [0], [0], [1], [0, 0, 1, 1], [], []>} : vector<8x256xbf16>, vector<256x128xbf16>, vector<8x128xf32> -> vector<8x128xf32>
    %c0_10 = arith.constant 0 : index
    %c0_11 = arith.constant 0 : index
    %22 = vector.load %arg5[%c0_10, %c0_11] : memref<1x128xf32, #tpu.memory_space<vmem>>, vector<1x128xf32>
    %23 = vector.broadcast %22 : vector<1x128xf32> to vector<8x128xf32>
    %24 = arith.addf %21, %23 : vector<8x128xf32>
    %cst_12 = arith.constant 0.000000e+00 : f32
    %25 = vector.broadcast %cst_12 : f32 to vector<8x128xf32>
    %26 = arith.maximumf %24, %25 : vector<8x128xf32>
    %cst_13 = arith.constant 0.000000e+00 : f32
    %27 = vector.broadcast %cst_13 : f32 to vector<8x128xf32>
    %28 = arith.minimumf %24, %27 : vector<8x128xf32>
    %29 = vector.shape_cast %6 : vector<8x1xi1> to vector<8x1xi1>
    %30 = vector.broadcast %29 : vector<8x1xi1> to vector<8x128xi1>
    %31 = arith.select %30, %26, %28 : vector<8x128xi1>, vector<8x128xf32>
    %32 = arith.truncf %31 : vector<8x128xf32> to vector<8x128xbf16>
    %c0_14 = arith.constant 0 : index
    %c0_15 = arith.constant 0 : index
    %33 = vector.load %arg6[%c0_14, %c0_15] : memref<128x128xbf16, #tpu.memory_space<vmem>>, vector<128x128xbf16>
    %cst_16 = arith.constant dense<0.000000e+00> : vector<8x128xf32>
    %34 = tpu.matmul %32, %33, %cst_16 {dimension_numbers = #tpu.dot_dimension_numbers<[1], [0], [0], [1], [0, 0, 1, 1], [], []>} : vector<8x128xbf16>, vector<128x128xbf16>, vector<8x128xf32> -> vector<8x128xf32>
    %c0_17 = arith.constant 0 : index
    %c0_18 = arith.constant 0 : index
    %35 = vector.load %arg7[%c0_17, %c0_18] : memref<1x128xf32, #tpu.memory_space<vmem>>, vector<1x128xf32>
    %36 = vector.broadcast %35 : vector<1x128xf32> to vector<8x128xf32>
    %37 = arith.addf %34, %36 : vector<8x128xf32>
    %cst_19 = arith.constant 0.000000e+00 : f32
    %38 = vector.broadcast %cst_19 : f32 to vector<8x128xf32>
    %39 = arith.maximumf %37, %38 : vector<8x128xf32>
    %cst_20 = arith.constant 0.000000e+00 : f32
    %40 = vector.broadcast %cst_20 : f32 to vector<8x128xf32>
    %41 = arith.minimumf %37, %40 : vector<8x128xf32>
    %42 = vector.shape_cast %6 : vector<8x1xi1> to vector<8x1xi1>
    %43 = vector.broadcast %42 : vector<8x1xi1> to vector<8x128xi1>
    %44 = arith.select %43, %39, %41 : vector<8x128xi1>, vector<8x128xf32>
    %45 = arith.truncf %44 : vector<8x128xf32> to vector<8x128xbf16>
    %c0_21 = arith.constant 0 : index
    %c0_22 = arith.constant 0 : index
    %46 = vector.load %arg8[%c0_21, %c0_22] : memref<128x128xbf16, #tpu.memory_space<vmem>>, vector<128x128xbf16>
    %cst_23 = arith.constant dense<0.000000e+00> : vector<8x128xf32>
    %47 = tpu.matmul %45, %46, %cst_23 {dimension_numbers = #tpu.dot_dimension_numbers<[1], [0], [0], [1], [0, 0, 1, 1], [], []>} : vector<8x128xbf16>, vector<128x128xbf16>, vector<8x128xf32> -> vector<8x128xf32>
    %c0_24 = arith.constant 0 : index
    %c0_25 = arith.constant 0 : index
    %48 = vector.load %arg9[%c0_24, %c0_25] : memref<1x128xf32, #tpu.memory_space<vmem>>, vector<1x128xf32>
    %49 = vector.broadcast %48 : vector<1x128xf32> to vector<8x128xf32>
    %50 = arith.addf %47, %49 : vector<8x128xf32>
    %51 = vector.extract_strided_slice %50 {offsets = [0, 0], sizes = [8, 16], strides = [1, 1]} : vector<8x128xf32> to vector<8x16xf32>
    %cst_26 = arith.constant dense<0xFF800000> : vector<8xf32>
    %52 = vector.multi_reduction <maximumf>, %51, %cst_26 [1] : vector<8x16xf32> to vector<8xf32>
    %53 = vector.shape_cast %52 : vector<8xf32> to vector<8x1xf32>
    %54 = vector.broadcast %53 : vector<8x1xf32> to vector<8x16xf32>
    %55 = arith.subf %51, %54 : vector<8x16xf32>
    %56 = math.exp %55 : vector<8x16xf32>
    %cst_27 = arith.constant dense<0.000000e+00> : vector<8xf32>
    %57 = vector.multi_reduction <add>, %56, %cst_27 [1] : vector<8x16xf32> to vector<8xf32>
    %58 = vector.shape_cast %57 : vector<8xf32> to vector<8x1xf32>
    %59 = math.log %58 : vector<8x1xf32>
    %60 = vector.broadcast %59 : vector<8x1xf32> to vector<8x16xf32>
    %61 = arith.subf %55, %60 : vector<8x16xf32>
    %c0_28 = arith.constant 0 : index
    %c0_29 = arith.constant 0 : index
    %62 = vector.load %arg10[%c0_28, %c0_29] : memref<8x16xf32, #tpu.memory_space<vmem>>, vector<8x16xf32>
    tpu.vector_store %arg10[%c0_28, %c0_29], %61 {strides = array<i32>} : memref<8x16xf32, #tpu.memory_space<vmem>>, vector<8x16xf32>,
    return
  }
  func.func @transform_0(%arg0: i32) -> (i32, i32) {
    %c0_i32 = arith.constant 0 : i32
    %c0_i32_0 = arith.constant 0 : i32
    return %arg0, %c0_i32 : i32, i32
  }
  func.func @transform_1(%arg0: i32) -> (i32, i32) {
    %c0_i32 = arith.constant 0 : i32
    %c0_i32_0 = arith.constant 0 : i32
    %c0_i32_1 = arith.constant 0 : i32
    return %c0_i32, %c0_i32_0 : i32, i32
  }
  func.func @transform_2(%arg0: i32) -> (i32, i32) {
    %c0_i32 = arith.constant 0 : i32
    %c0_i32_0 = arith.constant 0 : i32
    %c0_i32_1 = arith.constant 0 : i32
    return %c0_i32, %c0_i32_0 : i32, i32
  }
  func.func @transform_3(%arg0: i32) -> (i32, i32) {
    %c0_i32 = arith.constant 0 : i32
    %c0_i32_0 = arith.constant 0 : i32
    %c0_i32_1 = arith.constant 0 : i32
    return %c0_i32, %c0_i32_0 : i32, i32
  }
  func.func @transform_4(%arg0: i32) -> (i32, i32) {
    %c0_i32 = arith.constant 0 : i32
    %c0_i32_0 = arith.constant 0 : i32
    %c0_i32_1 = arith.constant 0 : i32
    return %c0_i32, %c0_i32_0 : i32, i32
  }
  func.func @transform_5(%arg0: i32) -> (i32, i32) {
    %c0_i32 = arith.constant 0 : i32
    %c0_i32_0 = arith.constant 0 : i32
    %c0_i32_1 = arith.constant 0 : i32
    return %c0_i32, %c0_i32_0 : i32, i32
  }
  func.func @transform_6(%arg0: i32) -> (i32, i32) {
    %c0_i32 = arith.constant 0 : i32
    %c0_i32_0 = arith.constant 0 : i32
    %c0_i32_1 = arith.constant 0 : i32
    return %c0_i32, %c0_i32_0 : i32, i32
  }
  func.func @transform_7(%arg0: i32) -> (i32, i32) {
    %c0_i32 = arith.constant 0 : i32
    %c0_i32_0 = arith.constant 0 : i32
    %c0_i32_1 = arith.constant 0 : i32
    return %c0_i32, %c0_i32_0 : i32, i32
  }
  func.func @transform_8(%arg0: i32) -> (i32, i32) {
    %c0_i32 = arith.constant 0 : i32
    %c0_i32_0 = arith.constant 0 : i32
    %c0_i32_1 = arith.constant 0 : i32
    return %c0_i32, %c0_i32_0 : i32, i32
  }
  func.func @transform_9(%arg0: i32) -> (i32, i32) {
    %c0_i32 = arith.constant 0 : i32
    %c0_i32_0 = arith.constant 0 : i32
    return %arg0, %c0_i32 : i32, i32
  }
}

</mosaic_0001>

<llo_original>
// kernel: tpu_custom_call.1
$region0: #{tpu_custom_call.1}
  #allocation0 [shape = 'u32[]', space=smem, size = 0x4, offset = 0x4, fixed_abs, tag = 'smem constant byte address 0x4 - core index']
  #allocation1 [shape = 'u32[144,128]{1,0:T(1,128)}', space=vmem, size = 0x12000, scoped, tag = 'internal scratch']
  %s0 = inlined_call_operand.hbm [shape: f32[8,784], index: 0, kind: input, shape index: {}]
  %s1 = inlined_call_operand.hbm [shape: bf16[784,256], index: 1, kind: input, shape index: {}]
  %s2 = inlined_call_operand.vmem [shape: f32[1,256], index: 2, kind: input, shape index: {}]
  %s3 = inlined_call_operand.hbm [shape: bf16[256,128], index: 3, kind: input, shape index: {}]
  %s4 = inlined_call_operand.vmem [shape: f32[1,128], index: 4, kind: input, shape index: {}]
  %s5 = inlined_call_operand.hbm [shape: bf16[128,128], index: 5, kind: input, shape index: {}]
  %s6 = inlined_call_operand.vmem [shape: f32[1,128], index: 6, kind: input, shape index: {}]
  %s7 = inlined_call_operand.hbm [shape: bf16[128,128], index: 7, kind: input, shape index: {}]
  %s8 = inlined_call_operand.vmem [shape: f32[1,128], index: 8, kind: input, shape index: {}]
  %s9 = inlined_call_operand.hbm [shape: f32[8,16], index: 9, kind: output, shape index: {}]
  %s10 = sld [smem:[#allocation0]]
  $region66: #{tpu_custom_call.1} parent=0
    _
  %s12 = ssub.s32 1, %s10
  %s13 = scalar_select 0, %s12, %s10
  $region1: #{tpu_custom_call.1} parent=0
    #allocation2 [shape = 'u8[28672]{0}', space=vmem, size = 0x7000, scoped, tag = 'input window, operand 0, single buffered']
    #allocation3 [shape = 's32[1]{0}', space=sflag, size = 0x4, scoped, tag = 'scoped memory for tpu_custom_call.1']
    #allocation4 [shape = 's32[1]{0}', space=sflag, size = 0x4, scoped, tag = 'scoped memory for tpu_custom_call.1']
    #allocation5 [shape = 'u8[401408]{0}', space=vmem, size = 0x62000, scoped, tag = 'input window, operand 1, single buffered']
    #allocation6 [shape = 's32[1]{0}', space=sflag, size = 0x4, scoped, tag = 'scoped memory for tpu_custom_call.1']
    #allocation7 [shape = 'u8[65536]{0}', space=vmem, size = 0x10000, scoped, tag = 'input window, operand 3, single buffered']
    #allocation8 [shape = 'u8[32768]{0}', space=vmem, size = 0x8000, scoped, tag = 'input window, operand 5, single buffered']
    #allocation9 [shape = 's32[1]{0}', space=sflag, size = 0x4, scoped, tag = 'scoped memory for tpu_custom_call.1']
    #allocation10 [shape = 'u8[32768]{0}', space=vmem, size = 0x8000, scoped, tag = 'input window, operand 7, single buffered']
    #allocation11 [shape = 'u8[4096]{0}', space=vmem, size = 0x1000, scoped, tag = 'output window, operand 0, single buffered']
    %14 = vsyncpa [#allocation3], 0
    %15 = vsyncpa [#allocation6], 0
    %16 = vsyncpa [#allocation9], 0
    %17 = vsyncpa [#allocation4], 0
    // Predicated region
    $region2: #{tpu_custom_call.1} parent=1 // pred_check
      _
    $region3: #{tpu_custom_call.1} parent=1 // pred_check_branch
      %19 = sbr.rel (0) target = $region5
    $region4: #{tpu_custom_call.1} parent=1 // pred_region
      %s21 = ssub.s32 896, 896
      %22 = vsyncadd [#allocation3], %s21
      %s24 = sshll.u32 [#allocation2], 4
      %s25 = int_to_ptr.vmem [resolvable:$true] %s24
      %27 = dma.hbm_to_vmem [thread:$0]  %s0, 896, %s25, [#allocation3]
    $region5: #{tpu_custom_call.1} parent=1 // pred_fallthru
      _
    // Predicated region
    $region6: #{tpu_custom_call.1} parent=1 // pred_check
      _
    $region7: #{tpu_custom_call.1} parent=1 // pred_check_branch
      %29 = sbr.rel (0) target = $region9
    $region8: #{tpu_custom_call.1} parent=1 // pred_region
      %s31 = ssub.s32 12544, 12544
      %32 = vsyncadd [#allocation6], %s31
      %s33 = sshll.u32 [#allocation5], 4
      %s34 = int_to_ptr.vmem [resolvable:$true] %s33
      %39 = dma.hbm_to_vmem [thread:$0]  %s1, 12544, %s34, [#allocation6], 128, 128, 8
    $region9: #{tpu_custom_call.1} parent=1 // pred_fallthru
      _
    // Predicated region
    $region10: #{tpu_custom_call.1} parent=1 // pred_check
      _
    $region11: #{tpu_custom_call.1} parent=1 // pred_check_branch
      %41 = sbr.rel (0) target = $region13
    $region12: #{tpu_custom_call.1} parent=1 // pred_region
      _
    $region13: #{tpu_custom_call.1} parent=1 // pred_fallthru
      _
    // Predicated region
    $region14: #{tpu_custom_call.1} parent=1 // pred_check
      _
    $region15: #{tpu_custom_call.1} parent=1 // pred_check_branch
      %43 = sbr.rel (0) target = $region17
    $region16: #{tpu_custom_call.1} parent=1 // pred_region
      %s45 = ssub.s32 2048, 2048
      %46 = vsyncadd [#allocation6], %s45
      %s47 = sshll.u32 [#allocation7], 4
      %s48 = int_to_ptr.vmem [resolvable:$true] %s47
      %53 = dma.hbm_to_vmem [thread:$0]  %s3, 2048, %s48, [#allocation6], 64, 64, 4
    $region17: #{tpu_custom_call.1} parent=1 // pred_fallthru
      _
    // Predicated region
    $region18: #{tpu_custom_call.1} parent=1 // pred_check
      _
    $region19: #{tpu_custom_call.1} parent=1 // pred_check_branch
      %55 = sbr.rel (0) target = $region21
    $region20: #{tpu_custom_call.1} parent=1 // pred_region
      _
    $region21: #{tpu_custom_call.1} parent=1 // pred_fallthru
      _
    // Predicated region
    $region22: #{tpu_custom_call.1} parent=1 // pred_check
      _
    $region23: #{tpu_custom_call.1} parent=1 // pred_check_branch
      %57 = sbr.rel (0) target = $region25
    $region24: #{tpu_custom_call.1} parent=1 // pred_region
      %s59 = ssub.s32 1024, 1024
      %60 = vsyncadd [#allocation9], %s59
      %s61 = sshll.u32 [#allocation8], 4
      %s62 = int_to_ptr.vmem [resolvable:$true] %s61
      %67 = dma.hbm_to_vmem [thread:$0]  %s5, 1024, %s62, [#allocation9], 64, 64, 4
    $region25: #{tpu_custom_call.1} parent=1 // pred_fallthru
      _
    // Predicated region
    $region26: #{tpu_custom_call.1} parent=1 // pred_check
      _
    $region27: #{tpu_custom_call.1} parent=1 // pred_check_branch
      %69 = sbr.rel (0) target = $region29
    $region28: #{tpu_custom_call.1} parent=1 // pred_region
      _
    $region29: #{tpu_custom_call.1} parent=1 // pred_fallthru
      _
    // Predicated region
    $region30: #{tpu_custom_call.1} parent=1 // pred_check
      _
    $region31: #{tpu_custom_call.1} parent=1 // pred_check_branch
      %71 = sbr.rel (0) target = $region33
    $region32: #{tpu_custom_call.1} parent=1 // pred_region
      %s73 = ssub.s32 1024, 1024
      %74 = vsyncadd [#allocation9], %s73
      %s75 = sshll.u32 [#allocation10], 4
      %s76 = int_to_ptr.vmem [resolvable:$true] %s75
      %81 = dma.hbm_to_vmem [thread:$0]  %s7, 1024, %s76, [#allocation9], 64, 64, 4
    $region33: #{tpu_custom_call.1} parent=1 // pred_fallthru
      _
    // Predicated region
    $region34: #{tpu_custom_call.1} parent=1 // pred_check
      _
    $region35: #{tpu_custom_call.1} parent=1 // pred_check_branch
      %83 = sbr.rel (0) target = $region37
    $region36: #{tpu_custom_call.1} parent=1 // pred_region
      _
    $region37: #{tpu_custom_call.1} parent=1 // pred_fallthru
      _
    // Predicated region
    $region38: #{tpu_custom_call.1} parent=1 // pred_check
      _
    $region39: #{tpu_custom_call.1} parent=1 // pred_check_branch
      %85 = sbr.rel (0) target = $region41
    $region40: #{tpu_custom_call.1} parent=1 // pred_region
      %86 = dma.done [#allocation3], 896
    $region41: #{tpu_custom_call.1} parent=1 // pred_fallthru
      _
    // Predicated region
    $region42: #{tpu_custom_call.1} parent=1 // pred_check
      _
    $region43: #{tpu_custom_call.1} parent=1 // pred_check_branch
      %88 = sbr.rel (0) target = $region45
    $region44: #{tpu_custom_call.1} parent=1 // pred_region
      %89 = dma.done [#allocation6], 12544
    $region45: #{tpu_custom_call.1} parent=1 // pred_fallthru
      _
    // Predicated region
    $region46: #{tpu_custom_call.1} parent=1 // pred_check
      _
    $region47: #{tpu_custom_call.1} parent=1 // pred_check_branch
      %91 = sbr.rel (0) target = $region49
    $region48: #{tpu_custom_call.1} parent=1 // pred_region
      %92 = dma.done [#allocation6], 2048
    $region49: #{tpu_custom_call.1} parent=1 // pred_fallthru
      _
    // Predicated region
    $region50: #{tpu_custom_call.1} parent=1 // pred_check
      _
    $region51: #{tpu_custom_call.1} parent=1 // pred_check_branch
      %94 = sbr.rel (0) target = $region53
    $region52: #{tpu_custom_call.1} parent=1 // pred_region
      %95 = dma.done [#allocation9], 1024
    $region53: #{tpu_custom_call.1} parent=1 // pred_fallthru
      _
    // Predicated region
    $region54: #{tpu_custom_call.1} parent=1 // pred_check
      _
    $region55: #{tpu_custom_call.1} parent=1 // pred_check_branch
      %97 = sbr.rel (0) target = $region57
    $region56: #{tpu_custom_call.1} parent=1 // pred_region
      %98 = dma.done [#allocation9], 1024
    $region57: #{tpu_custom_call.1} parent=1 // pred_fallthru
      _
    %v100 = vld [vmem:[#allocation2] sm:$0xff]
    %v101 = vld [vmem:[#allocation2 + $0x8] sm:$0xff]
    %v102 = vld [vmem:[#allocation2 + $0x10] sm:$0xff]
    %v103 = vld [vmem:[#allocation2 + $0x18] sm:$0xff]
    %v104 = vld [vmem:[#allocation2 + $0x20] sm:$0xff]
    %v105 = vld [vmem:[#allocation2 + $0x28] sm:$0xff]
    %v106 = vld [vmem:[#allocation2 + $0x30] sm:$0xff]
    %v107 = vpack.c.bf16 %v100, %v100
    %v108 = vpack.c.bf16 %v101, %v101
    %v109 = vpack.c.bf16 %v102, %v102
    %v110 = vpack.c.bf16 %v103, %v103
    %v111 = vpack.c.bf16 %v104, %v104
    %v112 = vpack.c.bf16 %v105, %v105
    %v113 = vpack.c.bf16 %v106, %v106
    %v114 = vlaneseq
    %v115 = vshrl.u32 %v114, 7
    %v116 = vand.u32 %v115, 1
    %vm117 = vcmp.eq.s32.totalorder %v116, 0
    %v118 = vld [vmem:[#allocation5] sm:$0xff]
    %v119 = vld [vmem:[#allocation5 + $0x8] sm:$0xff]
    %v120 = vld [vmem:[#allocation5 + $0x10] sm:$0xff]
    %v121 = vld [vmem:[#allocation5 + $0x18] sm:$0xff]
    %v122 = vld [vmem:[#allocation5 + $0x20] sm:$0xff]
    %v123 = vld [vmem:[#allocation5 + $0x28] sm:$0xff]
    %v124 = vld [vmem:[#allocation5 + $0x30] sm:$0xff]
    %v125 = vld [vmem:[#allocation5 + $0x38] sm:$0xff]
    %v126 = vld [vmem:[#allocation5 + $0x40] sm:$0xff]
    %v127 = vld [vmem:[#allocation5 + $0x48] sm:$0xff]
    %v128 = vld [vmem:[#allocation5 + $0x50] sm:$0xff]
    %v129 = vld [vmem:[#allocation5 + $0x58] sm:$0xff]
    %v130 = vld [vmem:[#allocation5 + $0x60] sm:$0xff]
    %v131 = vld [vmem:[#allocation5 + $0x68] sm:$0xff]
    %v132 = vld [vmem:[#allocation5 + $0x70] sm:$0xff]
    %v133 = vld [vmem:[#allocation5 + $0x78] sm:$0xff]
    %v134 = vld [vmem:[#allocation5 + $0x80] sm:$0xff]
    %v135 = vld [vmem:[#allocation5 + $0x88] sm:$0xff]
    %v136 = vld [vmem:[#allocation5 + $0x90] sm:$0xff]
    %v137 = vld [vmem:[#allocation5 + $0x98] sm:$0xff]
    %v138 = vld [vmem:[#allocation5 + $0xa0] sm:$0xff]
    %v139 = vld [vmem:[#allocation5 + $0xa8] sm:$0xff]
    %v140 = vld [vmem:[#allocation5 + $0xb0] sm:$0xff]
    %v141 = vld [vmem:[#allocation5 + $0xb8] sm:$0xff]
    %v142 = vld [vmem:[#allocation5 + $0xc0] sm:$0xff]
    %v143 = vld [vmem:[#allocation5 + $0xc8] sm:$0xff]
    %v144 = vld [vmem:[#allocation5 + $0xd0] sm:$0xff]
    %v145 = vld [vmem:[#allocation5 + $0xd8] sm:$0xff]
    %v146 = vld [vmem:[#allocation5 + $0xe0] sm:$0xff]
    %v147 = vld [vmem:[#allocation5 + $0xe8] sm:$0xff]
    %v148 = vld [vmem:[#allocation5 + $0xf0] sm:$0xff]
    %v149 = vld [vmem:[#allocation5 + $0xf8] sm:$0xff]
    %v150 = vld [vmem:[#allocation5 + $0x100] sm:$0xff]
    %v151 = vld [vmem:[#allocation5 + $0x108] sm:$0xff]
    %v152 = vld [vmem:[#allocation5 + $0x110] sm:$0xff]
    %v153 = vld [vmem:[#allocation5 + $0x118] sm:$0xff]
    %v154 = vld [vmem:[#allocation5 + $0x120] sm:$0xff]
    %v155 = vld [vmem:[#allocation5 + $0x128] sm:$0xff]
    %v156 = vld [vmem:[#allocation5 + $0x130] sm:$0xff]
    %v157 = vld [vmem:[#allocation5 + $0x138] sm:$0xff]
    %v158 = vld [vmem:[#allocation5 + $0x140] sm:$0xff]
    %v159 = vld [vmem:[#allocation5 + $0x148] sm:$0xff]
    %v160 = vld [vmem:[#allocation5 + $0x150] sm:$0xff]
    %v161 = vld [vmem:[#allocation5 + $0x158] sm:$0xff]
    %v162 = vld [vmem:[#allocation5 + $0x160] sm:$0xff]
    %v163 = vld [vmem:[#allocation5 + $0x168] sm:$0xff]
    %v164 = vld [vmem:[#allocation5 + $0x170] sm:$0xff]
    %v165 = vld [vmem:[#allocation5 + $0x178] sm:$0xff]
    %v166 = vld [vmem:[#allocation5 + $0x180] sm:$0xff]
    %v167 = vld [vmem:[#allocation5 + $0x188] sm:$0xff]
    %v168 = vld [vmem:[#allocation5 + $0x190] sm:$0xff]
    %v169 = vld [vmem:[#allocation5 + $0x198] sm:$0xff]
    %v170 = vld [vmem:[#allocation5 + $0x1a0] sm:$0xff]
    %v171 = vld [vmem:[#allocation5 + $0x1a8] sm:$0xff]
    %v172 = vld [vmem:[#allocation5 + $0x1b0] sm:$0xff]
    %v173 = vld [vmem:[#allocation5 + $0x1b8] sm:$0xff]
    %v174 = vld [vmem:[#allocation5 + $0x1c0] sm:$0xff]
    %v175 = vld [vmem:[#allocation5 + $0x1c8] sm:$0xff]
    %v176 = vld [vmem:[#allocation5 + $0x1d0] sm:$0xff]
    %v177 = vld [vmem:[#allocation5 + $0x1d8] sm:$0xff]
    %v178 = vld [vmem:[#allocation5 + $0x1e0] sm:$0xff]
    %v179 = vld [vmem:[#allocation5 + $0x1e8] sm:$0xff]
    %v180 = vld [vmem:[#allocation5 + $0x1f0] sm:$0xff]
    %v181 = vld [vmem:[#allocation5 + $0x1f8] sm:$0xff]
    %v182 = vld [vmem:[#allocation5 + $0x200] sm:$0xff]
    %v183 = vld [vmem:[#allocation5 + $0x208] sm:$0xff]
    %v184 = vld [vmem:[#allocation5 + $0x210] sm:$0xff]
    %v185 = vld [vmem:[#allocation5 + $0x218] sm:$0xff]
    %v186 = vld [vmem:[#allocation5 + $0x220] sm:$0xff]
    %v187 = vld [vmem:[#allocation5 + $0x228] sm:$0xff]
    %v188 = vld [vmem:[#allocation5 + $0x230] sm:$0xff]
    %v189 = vld [vmem:[#allocation5 + $0x238] sm:$0xff]
    %v190 = vld [vmem:[#allocation5 + $0x240] sm:$0xff]
    %v191 = vld [vmem:[#allocation5 + $0x248] sm:$0xff]
    %v192 = vld [vmem:[#allocation5 + $0x250] sm:$0xff]
    %v193 = vld [vmem:[#allocation5 + $0x258] sm:$0xff]
    %v194 = vld [vmem:[#allocation5 + $0x260] sm:$0xff]
    %v195 = vld [vmem:[#allocation5 + $0x268] sm:$0xff]
    %v196 = vld [vmem:[#allocation5 + $0x270] sm:$0xff]
    %v197 = vld [vmem:[#allocation5 + $0x278] sm:$0xff]
    %v198 = vld [vmem:[#allocation5 + $0x280] sm:$0xff]
    %v199 = vld [vmem:[#allocation5 + $0x288] sm:$0xff]
    %v200 = vld [vmem:[#allocation5 + $0x290] sm:$0xff]
    %v201 = vld [vmem:[#allocation5 + $0x298] sm:$0xff]
    %v202 = vld [vmem:[#allocation5 + $0x2a0] sm:$0xff]
    %v203 = vld [vmem:[#allocation5 + $0x2a8] sm:$0xff]
    %v204 = vld [vmem:[#allocation5 + $0x2b0] sm:$0xff]
    %v205 = vld [vmem:[#allocation5 + $0x2b8] sm:$0xff]
    %v206 = vld [vmem:[#allocation5 + $0x2c0] sm:$0xff]
    %v207 = vld [vmem:[#allocation5 + $0x2c8] sm:$0xff]
    %v208 = vld [vmem:[#allocation5 + $0x2d0] sm:$0xff]
    %v209 = vld [vmem:[#allocation5 + $0x2d8] sm:$0xff]
    %v210 = vld [vmem:[#allocation5 + $0x2e0] sm:$0xff]
    %v211 = vld [vmem:[#allocation5 + $0x2e8] sm:$0xff]
    %v212 = vld [vmem:[#allocation5 + $0x2f0] sm:$0xff]
    %v213 = vld [vmem:[#allocation5 + $0x2f8] sm:$0xff]
    %v214 = vld [vmem:[#allocation5 + $0x300] sm:$0xff]
    %v215 = vld [vmem:[#allocation5 + $0x308] sm:$0xff]
    %v216 = vld [vmem:[%s2] sm:$0x3]
    %v218 = vlaneseq
    %v219 = vshrl.u32 %v218, 7
    %v220 = vsub.s32 0, %v219
    %v221 = vrot.slane %v216, %v220
    %v222 = vlaneseq
    %v223 = vshrl.u32 %v222, 7
    %v224 = vsub.s32 1, %v223
    %v225 = vrot.slane %v216, %v224
    %v326 = vunpack.c.l.b16 %v118
    %v327 = vunpack.c.h.b16 %v118
    %v328 = vunpack.c.l.b16 %v119
    %v329 = vunpack.c.h.b16 %v119
    %v330 = vunpack.c.l.b16 %v120
    %v331 = vunpack.c.h.b16 %v120
    %v332 = vunpack.c.l.b16 %v121
    %v333 = vunpack.c.h.b16 %v121
    %v334 = vunpack.c.l.b16 %v122
    %v335 = vunpack.c.h.b16 %v122
    %v336 = vunpack.c.l.b16 %v123
    %v337 = vunpack.c.h.b16 %v123
    %v338 = vunpack.c.l.b16 %v124
    %v339 = vunpack.c.h.b16 %v124
    %v340 = vunpack.c.l.b16 %v125
    %v341 = vunpack.c.h.b16 %v125
    %v342 = vunpack.c.l.b16 %v126
    %v343 = vunpack.c.h.b16 %v126
    %v344 = vunpack.c.l.b16 %v127
    %v345 = vunpack.c.h.b16 %v127
    %v346 = vunpack.c.l.b16 %v128
    %v347 = vunpack.c.h.b16 %v128
    %v348 = vunpack.c.l.b16 %v129
    %v349 = vunpack.c.h.b16 %v129
    %v350 = vunpack.c.l.b16 %v130
    %v351 = vunpack.c.h.b16 %v130
    %v352 = vunpack.c.l.b16 %v131
    %v353 = vunpack.c.h.b16 %v131
    %v354 = vunpack.c.l.b16 %v132
    %v355 = vunpack.c.h.b16 %v132
    %v356 = vunpack.c.l.b16 %v133
    %v357 = vunpack.c.h.b16 %v133
    %v358 = vunpack.c.l.b16 %v134
    %v359 = vunpack.c.h.b16 %v134
    %v360 = vunpack.c.l.b16 %v135
    %v361 = vunpack.c.h.b16 %v135
    %v362 = vunpack.c.l.b16 %v136
    %v363 = vunpack.c.h.b16 %v136
    %v364 = vunpack.c.l.b16 %v137
    %v365 = vunpack.c.h.b16 %v137
    %v366 = vunpack.c.l.b16 %v138
    %v367 = vunpack.c.h.b16 %v138
    %v368 = vunpack.c.l.b16 %v139
    %v369 = vunpack.c.h.b16 %v139
    %v370 = vunpack.c.l.b16 %v140
    %v371 = vunpack.c.h.b16 %v140
    %v372 = vunpack.c.l.b16 %v141
    %v373 = vunpack.c.h.b16 %v141
    %v374 = vunpack.c.l.b16 %v142
    %v375 = vunpack.c.h.b16 %v142
    %v376 = vunpack.c.l.b16 %v143
    %v377 = vunpack.c.h.b16 %v143
    %v378 = vunpack.c.l.b16 %v144
    %v379 = vunpack.c.h.b16 %v144
    %v380 = vunpack.c.l.b16 %v145
    %v381 = vunpack.c.h.b16 %v145
    %v382 = vunpack.c.l.b16 %v146
    %v383 = vunpack.c.h.b16 %v146
    %v384 = vunpack.c.l.b16 %v147
    %v385 = vunpack.c.h.b16 %v147
    %v386 = vunpack.c.l.b16 %v148
    %v387 = vunpack.c.h.b16 %v148
    %v388 = vunpack.c.l.b16 %v149
    %v389 = vunpack.c.h.b16 %v149
    %v390 = vunpack.c.l.b16 %v150
    %v391 = vunpack.c.h.b16 %v150
    %v392 = vunpack.c.l.b16 %v151
    %v393 = vunpack.c.h.b16 %v151
    %v394 = vunpack.c.l.b16 %v152
    %v395 = vunpack.c.h.b16 %v152
    %v396 = vunpack.c.l.b16 %v153
    %v397 = vunpack.c.h.b16 %v153
    %v398 = vunpack.c.l.b16 %v154
    %v399 = vunpack.c.h.b16 %v154
    %v400 = vunpack.c.l.b16 %v155
    %v401 = vunpack.c.h.b16 %v155
    %v402 = vunpack.c.l.b16 %v156
    %v403 = vunpack.c.h.b16 %v156
    %v404 = vunpack.c.l.b16 %v157
    %v405 = vunpack.c.h.b16 %v157
    %v406 = vunpack.c.l.b16 %v158
    %v407 = vunpack.c.h.b16 %v158
    %v408 = vunpack.c.l.b16 %v159
    %v409 = vunpack.c.h.b16 %v159
    %v410 = vunpack.c.l.b16 %v160
    %v411 = vunpack.c.h.b16 %v160
    %v412 = vunpack.c.l.b16 %v161
    %v413 = vunpack.c.h.b16 %v161
    %v414 = vunpack.c.l.b16 %v162
    %v415 = vunpack.c.h.b16 %v162
    %v416 = vunpack.c.l.b16 %v163
    %v417 = vunpack.c.h.b16 %v163
    %v418 = vunpack.c.l.b16 %v164
    %v419 = vunpack.c.h.b16 %v164
    %v420 = vunpack.c.l.b16 %v165
    %v421 = vunpack.c.h.b16 %v165
    %v422 = vunpack.c.l.b16 %v166
    %v423 = vunpack.c.h.b16 %v166
    %v424 = vunpack.c.l.b16 %v167
    %v425 = vunpack.c.h.b16 %v167
    %v426 = vunpack.c.l.b16 %v168
    %v427 = vunpack.c.h.b16 %v168
    %v428 = vunpack.c.l.b16 %v169
    %v429 = vunpack.c.h.b16 %v169
    %v430 = vunpack.c.l.b16 %v170
    %v431 = vunpack.c.h.b16 %v170
    %v432 = vunpack.c.l.b16 %v171
    %v433 = vunpack.c.h.b16 %v171
    %v434 = vunpack.c.l.b16 %v172
    %v435 = vunpack.c.h.b16 %v172
    %v436 = vunpack.c.l.b16 %v173
    %v437 = vunpack.c.h.b16 %v173
    %v438 = vunpack.c.l.b16 %v174
    %v439 = vunpack.c.h.b16 %v174
    %v440 = vunpack.c.l.b16 %v175
    %v441 = vunpack.c.h.b16 %v175
    %v442 = vunpack.c.l.b16 %v176
    %v443 = vunpack.c.h.b16 %v176
    %v444 = vunpack.c.l.b16 %v177
    %v445 = vunpack.c.h.b16 %v177
    %v446 = vunpack.c.l.b16 %v178
    %v447 = vunpack.c.h.b16 %v178
    %v448 = vunpack.c.l.b16 %v179
    %v449 = vunpack.c.h.b16 %v179
    %v450 = vunpack.c.l.b16 %v180
    %v451 = vunpack.c.h.b16 %v180
    %v452 = vunpack.c.l.b16 %v181
    %v453 = vunpack.c.h.b16 %v181
    %v454 = vunpack.c.l.b16 %v182
    %v455 = vunpack.c.h.b16 %v182
    %v456 = vunpack.c.l.b16 %v183
    %v457 = vunpack.c.h.b16 %v183
    %v458 = vunpack.c.l.b16 %v184
    %v459 = vunpack.c.h.b16 %v184
    %v460 = vunpack.c.l.b16 %v185
    %v461 = vunpack.c.h.b16 %v185
    %v462 = vunpack.c.l.b16 %v186
    %v463 = vunpack.c.h.b16 %v186
    %v464 = vunpack.c.l.b16 %v187
    %v465 = vunpack.c.h.b16 %v187
    %v466 = vunpack.c.l.b16 %v188
    %v467 = vunpack.c.h.b16 %v188
    %v468 = vunpack.c.l.b16 %v189
    %v469 = vunpack.c.h.b16 %v189
    %v470 = vunpack.c.l.b16 %v190
    %v471 = vunpack.c.h.b16 %v190
    %v472 = vunpack.c.l.b16 %v191
    %v473 = vunpack.c.h.b16 %v191
    %v474 = vunpack.c.l.b16 %v192
    %v475 = vunpack.c.h.b16 %v192
    %v476 = vunpack.c.l.b16 %v193
    %v477 = vunpack.c.h.b16 %v193
    %v478 = vunpack.c.l.b16 %v194
    %v479 = vunpack.c.h.b16 %v194
    %v480 = vunpack.c.l.b16 %v195
    %v481 = vunpack.c.h.b16 %v195
    %v482 = vunpack.c.l.b16 %v196
    %v483 = vunpack.c.h.b16 %v196
    %v484 = vunpack.c.l.b16 %v197
    %v485 = vunpack.c.h.b16 %v197
    %v486 = vunpack.c.l.b16 %v198
    %v487 = vunpack.c.h.b16 %v198
    %v488 = vunpack.c.l.b16 %v199
    %v489 = vunpack.c.h.b16 %v199
    %v490 = vunpack.c.l.b16 %v200
    %v491 = vunpack.c.h.b16 %v200
    %v492 = vunpack.c.l.b16 %v201
    %v493 = vunpack.c.h.b16 %v201
    %v494 = vunpack.c.l.b16 %v202
    %v495 = vunpack.c.h.b16 %v202
    %v496 = vunpack.c.l.b16 %v203
    %v497 = vunpack.c.h.b16 %v203
    %v498 = vunpack.c.l.b16 %v204
    %v499 = vunpack.c.h.b16 %v204
    %v500 = vunpack.c.l.b16 %v205
    %v501 = vunpack.c.h.b16 %v205
    %v502 = vunpack.c.l.b16 %v206
    %v503 = vunpack.c.h.b16 %v206
    %v504 = vunpack.c.l.b16 %v207
    %v505 = vunpack.c.h.b16 %v207
    %v506 = vunpack.c.l.b16 %v208
    %v507 = vunpack.c.h.b16 %v208
    %v508 = vunpack.c.l.b16 %v209
    %v509 = vunpack.c.h.b16 %v209
    %v510 = vunpack.c.l.b16 %v210
    %v511 = vunpack.c.h.b16 %v210
    %v512 = vunpack.c.l.b16 %v211
    %v513 = vunpack.c.h.b16 %v211
    %v514 = vunpack.c.l.b16 %v212
    %v515 = vunpack.c.h.b16 %v212
    %v516 = vunpack.c.l.b16 %v213
    %v517 = vunpack.c.h.b16 %v213
    %v518 = vunpack.c.l.b16 %v214
    %v519 = vunpack.c.h.b16 %v214
    %v520 = vunpack.c.l.b16 %v215
    %v521 = vunpack.c.h.b16 %v215
    %v522 = vpack.c.b16 %v328, %v326
    %v523 = vpack.c.b16 %v329, %v327
    %v524 = vpack.c.b16 %v332, %v330
    %v525 = vpack.c.b16 %v333, %v331
    %v526 = vpack.c.b16 %v336, %v334
    %v527 = vpack.c.b16 %v337, %v335
    %v528 = vpack.c.b16 %v340, %v338
    %v529 = vpack.c.b16 %v341, %v339
    %v530 = vpack.c.b16 %v344, %v342
    %v531 = vpack.c.b16 %v345, %v343
    %v532 = vpack.c.b16 %v348, %v346
    %v533 = vpack.c.b16 %v349, %v347
    %v534 = vpack.c.b16 %v352, %v350
    %v535 = vpack.c.b16 %v353, %v351
    %v536 = vpack.c.b16 %v356, %v354
    %v537 = vpack.c.b16 %v357, %v355
    %v538 = vpack.c.b16 %v360, %v358
    %v539 = vpack.c.b16 %v361, %v359
    %v540 = vpack.c.b16 %v364, %v362
    %v541 = vpack.c.b16 %v365, %v363
    %v542 = vpack.c.b16 %v368, %v366
    %v543 = vpack.c.b16 %v369, %v367
    %v544 = vpack.c.b16 %v372, %v370
    %v545 = vpack.c.b16 %v373, %v371
    %v546 = vpack.c.b16 %v376, %v374
    %v547 = vpack.c.b16 %v377, %v375
    %v548 = vpack.c.b16 %v380, %v378
    %v549 = vpack.c.b16 %v381, %v379
    %v550 = vpack.c.b16 %v384, %v382
    %v551 = vpack.c.b16 %v385, %v383
    %v552 = vpack.c.b16 %v388, %v386
    %v553 = vpack.c.b16 %v389, %v387
    %v554 = vpack.c.b16 %v392, %v390
    %v555 = vpack.c.b16 %v393, %v391
    %v556 = vpack.c.b16 %v396, %v394
    %v557 = vpack.c.b16 %v397, %v395
    %v558 = vpack.c.b16 %v400, %v398
    %v559 = vpack.c.b16 %v401, %v399
    %v560 = vpack.c.b16 %v404, %v402
    %v561 = vpack.c.b16 %v405, %v403
    %v562 = vpack.c.b16 %v408, %v406
    %v563 = vpack.c.b16 %v409, %v407
    %v564 = vpack.c.b16 %v412, %v410
    %v565 = vpack.c.b16 %v413, %v411
    %v566 = vpack.c.b16 %v416, %v414
    %v567 = vpack.c.b16 %v417, %v415
    %v568 = vpack.c.b16 %v420, %v418
    %v569 = vpack.c.b16 %v421, %v419
    %v570 = vpack.c.b16 %v424, %v422
    %v571 = vpack.c.b16 %v425, %v423
    %v572 = vpack.c.b16 %v428, %v426
    %v573 = vpack.c.b16 %v429, %v427
    %v574 = vpack.c.b16 %v432, %v430
    %v575 = vpack.c.b16 %v433, %v431
    %v576 = vpack.c.b16 %v436, %v434
    %v577 = vpack.c.b16 %v437, %v435
    %v578 = vpack.c.b16 %v440, %v438
    %v579 = vpack.c.b16 %v441, %v439
    %v580 = vpack.c.b16 %v444, %v442
    %v581 = vpack.c.b16 %v445, %v443
    %v582 = vpack.c.b16 %v448, %v446
    %v583 = vpack.c.b16 %v449, %v447
    %v584 = vpack.c.b16 %v452, %v450
    %v585 = vpack.c.b16 %v453, %v451
    %v586 = vpack.c.b16 %v456, %v454
    %v587 = vpack.c.b16 %v457, %v455
    %v588 = vpack.c.b16 %v460, %v458
    %v589 = vpack.c.b16 %v461, %v459
    %v590 = vpack.c.b16 %v464, %v462
    %v591 = vpack.c.b16 %v465, %v463
    %v592 = vpack.c.b16 %v468, %v466
    %v593 = vpack.c.b16 %v469, %v467
    %v594 = vpack.c.b16 %v472, %v470
    %v595 = vpack.c.b16 %v473, %v471
    %v596 = vpack.c.b16 %v476, %v474
    %v597 = vpack.c.b16 %v477, %v475
    %v598 = vpack.c.b16 %v480, %v478
    %v599 = vpack.c.b16 %v481, %v479
    %v600 = vpack.c.b16 %v484, %v482
    %v601 = vpack.c.b16 %v485, %v483
    %v602 = vpack.c.b16 %v488, %v486
    %v603 = vpack.c.b16 %v489, %v487
    %v604 = vpack.c.b16 %v492, %v490
    %v605 = vpack.c.b16 %v493, %v491
    %v606 = vpack.c.b16 %v496, %v494
    %v607 = vpack.c.b16 %v497, %v495
    %v608 = vpack.c.b16 %v500, %v498
    %v609 = vpack.c.b16 %v501, %v499
    %v610 = vpack.c.b16 %v504, %v502
    %v611 = vpack.c.b16 %v505, %v503
    %v612 = vpack.c.b16 %v508, %v506
    %v613 = vpack.c.b16 %v509, %v507
    %v614 = vpack.c.b16 %v512, %v510
    %v615 = vpack.c.b16 %v513, %v511
    %v616 = vpack.c.b16 %v516, %v514
    %v617 = vpack.c.b16 %v517, %v515
    %v618 = vpack.c.b16 %v520, %v518
    %v619 = vpack.c.b16 %v521, %v519
    %vm718 = vcmask 130048
    %v720 = vsel %vm718, %v113, 0
    %722 = vmatprep.subr.bf16.mxu0 %v537
    %723 = vmatpush1.bf16.msra.mxu0 %v536
    %724 = vmatprep.subr.bf16.mxu0 %v535
    %725 = vmatpush1.bf16.msra.mxu0 %v534
    %726 = vmatprep.subr.bf16.mxu0 %v533
    %727 = vmatpush1.bf16.msra.mxu0 %v532
    %728 = vmatprep.subr.bf16.mxu0 %v531
    %729 = vmatpush1.bf16.msra.mxu0 %v530
    %730 = vmatprep.subr.bf16.mxu0 %v529
    %731 = vmatpush1.bf16.msra.mxu0 %v528
    %732 = vmatprep.subr.bf16.mxu0 %v527
    %733 = vmatpush1.bf16.msra.mxu0 %v526
    %734 = vmatprep.subr.bf16.mxu0 %v525
    %735 = vmatpush1.bf16.msra.mxu0 %v524
    %736 = vmatprep.subr.bf16.mxu0 %v523
    %737 = vmatpush1.bf16.msra.mxu0 %v522
    %738 = vmatprep.subr.bf16.mxu0 %v553
    %739 = vmatpush2.bf16.msra.mxu0 %v552
    %740 = vmatprep.subr.bf16.mxu0 %v551
    %741 = vmatpush2.bf16.msra.mxu0 %v550
    %742 = vmatprep.subr.bf16.mxu0 %v549
    %743 = vmatpush2.bf16.msra.mxu0 %v548
    %744 = vmatprep.subr.bf16.mxu0 %v547
    %745 = vmatpush2.bf16.msra.mxu0 %v546
    %746 = vmatprep.subr.bf16.mxu0 %v545
    %747 = vmatpush2.bf16.msra.mxu0 %v544
    %748 = vmatprep.subr.bf16.mxu0 %v543
    %749 = vmatpush2.bf16.msra.mxu0 %v542
    %750 = vmatprep.subr.bf16.mxu0 %v541
    %751 = vmatpush2.bf16.msra.mxu0 %v540
    %752 = vmatprep.subr.bf16.mxu0 %v539
    %753 = vmatpush2.bf16.msra.mxu0 %v538
    %754 = vmatprep.mubr.bf16.mxu0 %v108
    %755 = vmatmul.mubr.bf16.gmra.mxu0 %v107
    %v756 = vpop.f32.mrf.mxu0
    %v757 = vadd.f32 %v221, %v756
    %v758 = vpop.f32.mrf.mxu0
    %v759 = vadd.f32 %v225, %v758
    %v760 = vpop.f32.mrf.mxu0
    %v761 = vpop.f32.mrf.mxu0
    %762 = vdwg.mxu0
    %763 = vmatprep.subr.bf16.mxu0 %v569
    %764 = vmatpush1.bf16.msra.mxu0 %v568
    %765 = vmatprep.subr.bf16.mxu0 %v567
    %766 = vmatpush1.bf16.msra.mxu0 %v566
    %767 = vmatprep.subr.bf16.mxu0 %v565
    %768 = vmatpush1.bf16.msra.mxu0 %v564
    %769 = vmatprep.subr.bf16.mxu0 %v563
    %770 = vmatpush1.bf16.msra.mxu0 %v562
    %771 = vmatprep.subr.bf16.mxu0 %v561
    %772 = vmatpush1.bf16.msra.mxu0 %v560
    %773 = vmatprep.subr.bf16.mxu0 %v559
    %774 = vmatpush1.bf16.msra.mxu0 %v558
    %775 = vmatprep.subr.bf16.mxu0 %v557
    %776 = vmatpush1.bf16.msra.mxu0 %v556
    %777 = vmatprep.subr.bf16.mxu0 %v555
    %778 = vmatpush1.bf16.msra.mxu0 %v554
    %779 = vmatprep.subr.bf16.mxu0 %v585
    %780 = vmatpush2.bf16.msra.mxu0 %v584
    %781 = vmatprep.subr.bf16.mxu0 %v583
    %782 = vmatpush2.bf16.msra.mxu0 %v582
    %783 = vmatprep.subr.bf16.mxu0 %v581
    %784 = vmatpush2.bf16.msra.mxu0 %v580
    %785 = vmatprep.subr.bf16.mxu0 %v579
    %786 = vmatpush2.bf16.msra.mxu0 %v578
    %787 = vmatprep.subr.bf16.mxu0 %v577
    %788 = vmatpush2.bf16.msra.mxu0 %v576
    %789 = vmatprep.subr.bf16.mxu0 %v575
    %790 = vmatpush2.bf16.msra.mxu0 %v574
    %791 = vmatprep.subr.bf16.mxu0 %v573
    %792 = vmatpush2.bf16.msra.mxu0 %v572
    %793 = vmatprep.subr.bf16.mxu0 %v571
    %794 = vmatpush2.bf16.msra.mxu0 %v570
    %795 = vmatprep.mubr.bf16.mxu0 %v110
    %796 = vmatmul.mubr.bf16.gmra.mxu0 %v109
    %v797 = vpop.f32.mrf.mxu0
    %v798 = vadd.f32 %v757, %v797
    %v799 = vpop.f32.mrf.mxu0
    %v800 = vadd.f32 %v759, %v799
    %v801 = vpop.f32.mrf.mxu0
    %v802 = vpop.f32.mrf.mxu0
    %803 = vdwg.mxu0
    %804 = vmatprep.subr.bf16.mxu0 %v601
    %805 = vmatpush1.bf16.msra.mxu0 %v600
    %806 = vmatprep.subr.bf16.mxu0 %v599
    %807 = vmatpush1.bf16.msra.mxu0 %v598
    %808 = vmatprep.subr.bf16.mxu0 %v597
    %809 = vmatpush1.bf16.msra.mxu0 %v596
    %810 = vmatprep.subr.bf16.mxu0 %v595
    %811 = vmatpush1.bf16.msra.mxu0 %v594
    %812 = vmatprep.subr.bf16.mxu0 %v593
    %813 = vmatpush1.bf16.msra.mxu0 %v592
    %814 = vmatprep.subr.bf16.mxu0 %v591
    %815 = vmatpush1.bf16.msra.mxu0 %v590
    %816 = vmatprep.subr.bf16.mxu0 %v589
    %817 = vmatpush1.bf16.msra.mxu0 %v588
    %818 = vmatprep.subr.bf16.mxu0 %v587
    %819 = vmatpush1.bf16.msra.mxu0 %v586
    %820 = vmatprep.subr.bf16.mxu0 %v617
    %821 = vmatpush2.bf16.msra.mxu0 %v616
    %822 = vmatprep.subr.bf16.mxu0 %v615
    %823 = vmatpush2.bf16.msra.mxu0 %v614
    %824 = vmatprep.subr.bf16.mxu0 %v613
    %825 = vmatpush2.bf16.msra.mxu0 %v612
    %826 = vmatprep.subr.bf16.mxu0 %v611
    %827 = vmatpush2.bf16.msra.mxu0 %v610
    %828 = vmatprep.subr.bf16.mxu0 %v609
    %829 = vmatpush2.bf16.msra.mxu0 %v608
    %830 = vmatprep.subr.bf16.mxu0 %v607
    %831 = vmatpush2.bf16.msra.mxu0 %v606
    %832 = vmatprep.subr.bf16.mxu0 %v605
    %833 = vmatpush2.bf16.msra.mxu0 %v604
    %834 = vmatprep.subr.bf16.mxu0 %v603
    %835 = vmatpush2.bf16.msra.mxu0 %v602
    %836 = vmatprep.mubr.bf16.mxu0 %v112
    %837 = vmatmul.mubr.bf16.gmra.mxu0 %v111
    %v838 = vpop.f32.mrf.mxu0
    %v839 = vadd.f32 %v798, %v838
    %v840 = vpop.f32.mrf.mxu0
    %v841 = vadd.f32 %v800, %v840
    %v842 = vpop.f32.mrf.mxu0
    %v843 = vpop.f32.mrf.mxu0
    %844 = vdwg.mxu0
    %845 = vmatprep.subr.bf16.mxu0 0
    %846 = vmatpush1.bf16.msra.mxu0 0
    %847 = vmatprep.subr.bf16.mxu0 0
    %848 = vmatpush1.bf16.msra.mxu0 0
    %849 = vmatprep.subr.bf16.mxu0 0
    %850 = vmatpush1.bf16.msra.mxu0 0
    %851 = vmatprep.subr.bf16.mxu0 0
    %852 = vmatpush1.bf16.msra.mxu0 0
    %853 = vmatprep.subr.bf16.mxu0 0
    %854 = vmatpush1.bf16.msra.mxu0 0
    %855 = vmatprep.subr.bf16.mxu0 0
    %856 = vmatpush1.bf16.msra.mxu0 0
    %857 = vmatprep.subr.bf16.mxu0 0
    %858 = vmatpush1.bf16.msra.mxu0 0
    %859 = vmatprep.subr.bf16.mxu0 %v619
    %860 = vmatpush1.bf16.msra.mxu0 %v618
    %861 = vmatprep.subr.bf16.mxu0 0
    %862 = vmatpush2.bf16.msra.mxu0 0
    %863 = vmatprep.subr.bf16.mxu0 0
    %864 = vmatpush2.bf16.msra.mxu0 0
    %865 = vmatprep.subr.bf16.mxu0 0
    %866 = vmatpush2.bf16.msra.mxu0 0
    %867 = vmatprep.subr.bf16.mxu0 0
    %868 = vmatpush2.bf16.msra.mxu0 0
    %869 = vmatprep.subr.bf16.mxu0 0
    %870 = vmatpush2.bf16.msra.mxu0 0
    %871 = vmatprep.subr.bf16.mxu0 0
    %872 = vmatpush2.bf16.msra.mxu0 0
    %873 = vmatprep.subr.bf16.mxu0 0
    %874 = vmatpush2.bf16.msra.mxu0 0
    %875 = vmatprep.subr.bf16.mxu0 0
    %876 = vmatpush2.bf16.msra.mxu0 0
    %877 = vmatprep.mubr.bf16.mxu0 0
    %878 = vmatmul.mubr.bf16.gmra.mxu0 %v720
    %v879 = vpop.f32.mrf.mxu0
    %v880 = vadd.f32 %v839, %v879
    %v881 = vpop.f32.mrf.mxu0
    %v882 = vadd.f32 %v841, %v881
    %v883 = vpop.f32.mrf.mxu0
    %v884 = vpop.f32.mrf.mxu0
    %885 = vdwg.mxu0
    %v886 = vmax.f32 %v880, 0.0
    %v887 = vmax.f32 %v882, 0.0
    %v888 = vmin.f32 %v880, 0.0
    %v889 = vmin.f32 %v882, 0.0
    %v890 = vsel %vm117, 1, 0
    %vm891 = vcmp.eq.s32.totalorder %v890, 1
    %v892 = vsel %vm891, %v886, %v888
    %v893 = vsel %vm891, %v887, %v889
    %v894 = vpack.c.bf16 %v892, %v892
    %v895 = vpack.c.bf16 %v893, %v893
    %v896 = vld [vmem:[#allocation7] sm:$0xf]
    %v897 = vld [vmem:[#allocation7 + $0x4] sm:$0xf]
    %v898 = vld [vmem:[#allocation7 + $0x8] sm:$0xf]
    %v899 = vld [vmem:[#allocation7 + $0xc] sm:$0xf]
    %v900 = vld [vmem:[#allocation7 + $0x10] sm:$0xf]
    %v901 = vld [vmem:[#allocation7 + $0x14] sm:$0xf]
    %v902 = vld [vmem:[#allocation7 + $0x18] sm:$0xf]
    %v903 = vld [vmem:[#allocation7 + $0x1c] sm:$0xf]
    %v904 = vld [vmem:[#allocation7 + $0x20] sm:$0xf]
    %v905 = vld [vmem:[#allocation7 + $0x24] sm:$0xf]
    %v906 = vld [vmem:[#allocation7 + $0x28] sm:$0xf]
    %v907 = vld [vmem:[#allocation7 + $0x2c] sm:$0xf]
    %v908 = vld [vmem:[#allocation7 + $0x30] sm:$0xf]
    %v909 = vld [vmem:[#allocation7 + $0x34] sm:$0xf]
    %v910 = vld [vmem:[#allocation7 + $0x38] sm:$0xf]
    %v911 = vld [vmem:[#allocation7 + $0x3c] sm:$0xf]
    %v912 = vld [vmem:[#allocation7 + $0x40] sm:$0xf]
    %v913 = vld [vmem:[#allocation7 + $0x44] sm:$0xf]
    %v914 = vld [vmem:[#allocation7 + $0x48] sm:$0xf]
    %v915 = vld [vmem:[#allocation7 + $0x4c] sm:$0xf]
    %v916 = vld [vmem:[#allocation7 + $0x50] sm:$0xf]
    %v917 = vld [vmem:[#allocation7 + $0x54] sm:$0xf]
    %v918 = vld [vmem:[#allocation7 + $0x58] sm:$0xf]
    %v919 = vld [vmem:[#allocation7 + $0x5c] sm:$0xf]
    %v920 = vld [vmem:[#allocation7 + $0x60] sm:$0xf]
    %v921 = vld [vmem:[#allocation7 + $0x64] sm:$0xf]
    %v922 = vld [vmem:[#allocation7 + $0x68] sm:$0xf]
    %v923 = vld [vmem:[#allocation7 + $0x6c] sm:$0xf]
    %v924 = vld [vmem:[#allocation7 + $0x70] sm:$0xf]
    %v925 = vld [vmem:[#allocation7 + $0x74] sm:$0xf]
    %v926 = vld [vmem:[#allocation7 + $0x78] sm:$0xf]
    %v927 = vld [vmem:[#allocation7 + $0x7c] sm:$0xf]
    %v928 = vld [vmem:[%s4] sm:$0x1]
    %v930 = vlaneseq
    %v931 = vshrl.u32 %v930, 7
    %v932 = vsub.s32 0, %v931
    %v933 = vrot.slane %v928, %v932
    %v967 = vunpack.c.l.b16 %v896
    %v968 = vunpack.c.l.b16 %v897
    %v969 = vunpack.c.l.b16 %v898
    %v970 = vunpack.c.l.b16 %v899
    %v971 = vunpack.c.l.b16 %v900
    %v972 = vunpack.c.l.b16 %v901
    %v973 = vunpack.c.l.b16 %v902
    %v974 = vunpack.c.l.b16 %v903
    %v975 = vunpack.c.l.b16 %v904
    %v976 = vunpack.c.l.b16 %v905
    %v977 = vunpack.c.l.b16 %v906
    %v978 = vunpack.c.l.b16 %v907
    %v979 = vunpack.c.l.b16 %v908
    %v980 = vunpack.c.l.b16 %v909
    %v981 = vunpack.c.l.b16 %v910
    %v982 = vunpack.c.l.b16 %v911
    %v983 = vunpack.c.l.b16 %v912
    %v984 = vunpack.c.l.b16 %v913
    %v985 = vunpack.c.l.b16 %v914
    %v986 = vunpack.c.l.b16 %v915
    %v987 = vunpack.c.l.b16 %v916
    %v988 = vunpack.c.l.b16 %v917
    %v989 = vunpack.c.l.b16 %v918
    %v990 = vunpack.c.l.b16 %v919
    %v991 = vunpack.c.l.b16 %v920
    %v992 = vunpack.c.l.b16 %v921
    %v993 = vunpack.c.l.b16 %v922
    %v994 = vunpack.c.l.b16 %v923
    %v995 = vunpack.c.l.b16 %v924
    %v996 = vunpack.c.l.b16 %v925
    %v997 = vunpack.c.l.b16 %v926
    %v998 = vunpack.c.l.b16 %v927
    %v999 = vpack.c.b16 %v968, %v967
    %v1000 = vpack.c.b16 %v970, %v969
    %v1001 = vpack.c.b16 %v972, %v971
    %v1002 = vpack.c.b16 %v974, %v973
    %v1003 = vpack.c.b16 %v976, %v975
    %v1004 = vpack.c.b16 %v978, %v977
    %v1005 = vpack.c.b16 %v980, %v979
    %v1006 = vpack.c.b16 %v982, %v981
    %v1007 = vpack.c.b16 %v984, %v983
    %v1008 = vpack.c.b16 %v986, %v985
    %v1009 = vpack.c.b16 %v988, %v987
    %v1010 = vpack.c.b16 %v990, %v989
    %v1011 = vpack.c.b16 %v992, %v991
    %v1012 = vpack.c.b16 %v994, %v993
    %v1013 = vpack.c.b16 %v996, %v995
    %v1014 = vpack.c.b16 %v998, %v997
    %1031 = vmatprep.subr.bf16.mxu0 0
    %1032 = vmatpush1.bf16.msra.mxu0 %v1006
    %1033 = vmatprep.subr.bf16.mxu0 0
    %1034 = vmatpush1.bf16.msra.mxu0 %v1005
    %1035 = vmatprep.subr.bf16.mxu0 0
    %1036 = vmatpush1.bf16.msra.mxu0 %v1004
    %1037 = vmatprep.subr.bf16.mxu0 0
    %1038 = vmatpush1.bf16.msra.mxu0 %v1003
    %1039 = vmatprep.subr.bf16.mxu0 0
    %1040 = vmatpush1.bf16.msra.mxu0 %v1002
    %1041 = vmatprep.subr.bf16.mxu0 0
    %1042 = vmatpush1.bf16.msra.mxu0 %v1001
    %1043 = vmatprep.subr.bf16.mxu0 0
    %1044 = vmatpush1.bf16.msra.mxu0 %v1000
    %1045 = vmatprep.subr.bf16.mxu0 0
    %1046 = vmatpush1.bf16.msra.mxu0 %v999
    %1047 = vmatprep.subr.bf16.mxu0 0
    %1048 = vmatpush2.bf16.msra.mxu0 %v1014
    %1049 = vmatprep.subr.bf16.mxu0 0
    %1050 = vmatpush2.bf16.msra.mxu0 %v1013
    %1051 = vmatprep.subr.bf16.mxu0 0
    %1052 = vmatpush2.bf16.msra.mxu0 %v1012
    %1053 = vmatprep.subr.bf16.mxu0 0
    %1054 = vmatpush2.bf16.msra.mxu0 %v1011
    %1055 = vmatprep.subr.bf16.mxu0 0
    %1056 = vmatpush2.bf16.msra.mxu0 %v1010
    %1057 = vmatprep.subr.bf16.mxu0 0
    %1058 = vmatpush2.bf16.msra.mxu0 %v1009
    %1059 = vmatprep.subr.bf16.mxu0 0
    %1060 = vmatpush2.bf16.msra.mxu0 %v1008
    %1061 = vmatprep.subr.bf16.mxu0 0
    %1062 = vmatpush2.bf16.msra.mxu0 %v1007
    %1063 = vmatprep.mubr.bf16.mxu0 %v895
    %1064 = vmatmul.mubr.bf16.gmra.mxu0 %v894
    %v1065 = vpop.f32.mrf.mxu0
    %v1066 = vadd.f32 %v933, %v1065
    %v1067 = vpop.f32.mrf.mxu0
    %v1068 = vpop.f32.mrf.mxu0
    %v1069 = vpop.f32.mrf.mxu0
    %1070 = vdwg.mxu0
    %v1071 = vmax.f32 %v1066, 0.0
    %v1072 = vmin.f32 %v1066, 0.0
    %v1073 = vsel %vm891, %v1071, %v1072
    %v1074 = vpack.c.bf16 %v1073, %v1073
    %v1075 = vld [vmem:[#allocation8] sm:$0xf]
    %v1076 = vld [vmem:[#allocation8 + $0x4] sm:$0xf]
    %v1077 = vld [vmem:[#allocation8 + $0x8] sm:$0xf]
    %v1078 = vld [vmem:[#allocation8 + $0xc] sm:$0xf]
    %v1079 = vld [vmem:[#allocation8 + $0x10] sm:$0xf]
    %v1080 = vld [vmem:[#allocation8 + $0x14] sm:$0xf]
    %v1081 = vld [vmem:[#allocation8 + $0x18] sm:$0xf]
    %v1082 = vld [vmem:[#allocation8 + $0x1c] sm:$0xf]
    %v1083 = vld [vmem:[#allocation8 + $0x20] sm:$0xf]
    %v1084 = vld [vmem:[#allocation8 + $0x24] sm:$0xf]
    %v1085 = vld [vmem:[#allocation8 + $0x28] sm:$0xf]
    %v1086 = vld [vmem:[#allocation8 + $0x2c] sm:$0xf]
    %v1087 = vld [vmem:[#allocation8 + $0x30] sm:$0xf]
    %v1088 = vld [vmem:[#allocation8 + $0x34] sm:$0xf]
    %v1089 = vld [vmem:[#allocation8 + $0x38] sm:$0xf]
    %v1090 = vld [vmem:[#allocation8 + $0x3c] sm:$0xf]
    %v1091 = vld [vmem:[%s6] sm:$0x1]
    %v1093 = vlaneseq
    %v1094 = vshrl.u32 %v1093, 7
    %v1095 = vsub.s32 0, %v1094
    %v1096 = vrot.slane %v1091, %v1095
    %v1114 = vunpack.c.l.b16 %v1075
    %v1115 = vunpack.c.l.b16 %v1076
    %v1116 = vunpack.c.l.b16 %v1077
    %v1117 = vunpack.c.l.b16 %v1078
    %v1118 = vunpack.c.l.b16 %v1079
    %v1119 = vunpack.c.l.b16 %v1080
    %v1120 = vunpack.c.l.b16 %v1081
    %v1121 = vunpack.c.l.b16 %v1082
    %v1122 = vunpack.c.l.b16 %v1083
    %v1123 = vunpack.c.l.b16 %v1084
    %v1124 = vunpack.c.l.b16 %v1085
    %v1125 = vunpack.c.l.b16 %v1086
    %v1126 = vunpack.c.l.b16 %v1087
    %v1127 = vunpack.c.l.b16 %v1088
    %v1128 = vunpack.c.l.b16 %v1089
    %v1129 = vunpack.c.l.b16 %v1090
    %v1130 = vpack.c.b16 %v1115, %v1114
    %v1131 = vpack.c.b16 %v1117, %v1116
    %v1132 = vpack.c.b16 %v1119, %v1118
    %v1133 = vpack.c.b16 %v1121, %v1120
    %v1134 = vpack.c.b16 %v1123, %v1122
    %v1135 = vpack.c.b16 %v1125, %v1124
    %v1136 = vpack.c.b16 %v1127, %v1126
    %v1137 = vpack.c.b16 %v1129, %v1128
    %1146 = vmatprep.subr.bf16.mxu0 0
    %1147 = vmatpush1.bf16.msra.mxu0 %v1137
    %1148 = vmatprep.subr.bf16.mxu0 0
    %1149 = vmatpush1.bf16.msra.mxu0 %v1136
    %1150 = vmatprep.subr.bf16.mxu0 0
    %1151 = vmatpush1.bf16.msra.mxu0 %v1135
    %1152 = vmatprep.subr.bf16.mxu0 0
    %1153 = vmatpush1.bf16.msra.mxu0 %v1134
    %1154 = vmatprep.subr.bf16.mxu0 0
    %1155 = vmatpush1.bf16.msra.mxu0 %v1133
    %1156 = vmatprep.subr.bf16.mxu0 0
    %1157 = vmatpush1.bf16.msra.mxu0 %v1132
    %1158 = vmatprep.subr.bf16.mxu0 0
    %1159 = vmatpush1.bf16.msra.mxu0 %v1131
    %1160 = vmatprep.subr.bf16.mxu0 0
    %1161 = vmatpush1.bf16.msra.mxu0 %v1130
    %1162 = vmatprep.subr.bf16.mxu0 0
    %1163 = vmatpush2.bf16.msra.mxu0 0
    %1164 = vmatprep.subr.bf16.mxu0 0
    %1165 = vmatpush2.bf16.msra.mxu0 0
    %1166 = vmatprep.subr.bf16.mxu0 0
    %1167 = vmatpush2.bf16.msra.mxu0 0
    %1168 = vmatprep.subr.bf16.mxu0 0
    %1169 = vmatpush2.bf16.msra.mxu0 0
    %1170 = vmatprep.subr.bf16.mxu0 0
    %1171 = vmatpush2.bf16.msra.mxu0 0
    %1172 = vmatprep.subr.bf16.mxu0 0
    %1173 = vmatpush2.bf16.msra.mxu0 0
    %1174 = vmatprep.subr.bf16.mxu0 0
    %1175 = vmatpush2.bf16.msra.mxu0 0
    %1176 = vmatprep.subr.bf16.mxu0 0
    %1177 = vmatpush2.bf16.msra.mxu0 0
    %1178 = vmatprep.mubr.bf16.mxu0 0
    %1179 = vmatmul.mubr.bf16.gmra.mxu0 %v1074
    %v1180 = vpop.f32.mrf.mxu0
    %v1181 = vadd.f32 %v1096, %v1180
    %v1182 = vpop.f32.mrf.mxu0
    %v1183 = vpop.f32.mrf.mxu0
    %v1184 = vpop.f32.mrf.mxu0
    %1185 = vdwg.mxu0
    %v1186 = vmax.f32 %v1181, 0.0
    %v1187 = vmin.f32 %v1181, 0.0
    %v1188 = vsel %vm891, %v1186, %v1187
    %v1189 = vpack.c.bf16 %v1188, %v1188
    %v1190 = vld [vmem:[#allocation10] sm:$0xf]
    %v1191 = vld [vmem:[#allocation10 + $0x4] sm:$0xf]
    %v1192 = vld [vmem:[#allocation10 + $0x8] sm:$0xf]
    %v1193 = vld [vmem:[#allocation10 + $0xc] sm:$0xf]
    %v1194 = vld [vmem:[#allocation10 + $0x10] sm:$0xf]
    %v1195 = vld [vmem:[#allocation10 + $0x14] sm:$0xf]
    %v1196 = vld [vmem:[#allocation10 + $0x18] sm:$0xf]
    %v1197 = vld [vmem:[#allocation10 + $0x1c] sm:$0xf]
    %v1198 = vld [vmem:[#allocation10 + $0x20] sm:$0xf]
    %v1199 = vld [vmem:[#allocation10 + $0x24] sm:$0xf]
    %v1200 = vld [vmem:[#allocation10 + $0x28] sm:$0xf]
    %v1201 = vld [vmem:[#allocation10 + $0x2c] sm:$0xf]
    %v1202 = vld [vmem:[#allocation10 + $0x30] sm:$0xf]
    %v1203 = vld [vmem:[#allocation10 + $0x34] sm:$0xf]
    %v1204 = vld [vmem:[#allocation10 + $0x38] sm:$0xf]
    %v1205 = vld [vmem:[#allocation10 + $0x3c] sm:$0xf]
    %v1206 = vld [vmem:[%s8] sm:$0x1]
    %v1208 = vlaneseq
    %v1209 = vshrl.u32 %v1208, 7
    %v1210 = vsub.s32 0, %v1209
    %v1211 = vrot.slane %v1206, %v1210
    %v1229 = vunpack.c.l.b16 %v1190
    %v1230 = vunpack.c.l.b16 %v1191
    %v1231 = vunpack.c.l.b16 %v1192
    %v1232 = vunpack.c.l.b16 %v1193
    %v1233 = vunpack.c.l.b16 %v1194
    %v1234 = vunpack.c.l.b16 %v1195
    %v1235 = vunpack.c.l.b16 %v1196
    %v1236 = vunpack.c.l.b16 %v1197
    %v1237 = vunpack.c.l.b16 %v1198
    %v1238 = vunpack.c.l.b16 %v1199
    %v1239 = vunpack.c.l.b16 %v1200
    %v1240 = vunpack.c.l.b16 %v1201
    %v1241 = vunpack.c.l.b16 %v1202
    %v1242 = vunpack.c.l.b16 %v1203
    %v1243 = vunpack.c.l.b16 %v1204
    %v1244 = vunpack.c.l.b16 %v1205
    %v1245 = vpack.c.b16 %v1230, %v1229
    %v1246 = vpack.c.b16 %v1232, %v1231
    %v1247 = vpack.c.b16 %v1234, %v1233
    %v1248 = vpack.c.b16 %v1236, %v1235
    %v1249 = vpack.c.b16 %v1238, %v1237
    %v1250 = vpack.c.b16 %v1240, %v1239
    %v1251 = vpack.c.b16 %v1242, %v1241
    %v1252 = vpack.c.b16 %v1244, %v1243
    %1261 = vmatprep.subr.bf16.mxu0 0
    %1262 = vmatpush1.bf16.msra.mxu0 %v1252
    %1263 = vmatprep.subr.bf16.mxu0 0
    %1264 = vmatpush1.bf16.msra.mxu0 %v1251
    %1265 = vmatprep.subr.bf16.mxu0 0
    %1266 = vmatpush1.bf16.msra.mxu0 %v1250
    %1267 = vmatprep.subr.bf16.mxu0 0
    %1268 = vmatpush1.bf16.msra.mxu0 %v1249
    %1269 = vmatprep.subr.bf16.mxu0 0
    %1270 = vmatpush1.bf16.msra.mxu0 %v1248
    %1271 = vmatprep.subr.bf16.mxu0 0
    %1272 = vmatpush1.bf16.msra.mxu0 %v1247
    %1273 = vmatprep.subr.bf16.mxu0 0
    %1274 = vmatpush1.bf16.msra.mxu0 %v1246
    %1275 = vmatprep.subr.bf16.mxu0 0
    %1276 = vmatpush1.bf16.msra.mxu0 %v1245
    %1277 = vmatprep.subr.bf16.mxu0 0
    %1278 = vmatpush2.bf16.msra.mxu0 0
    %1279 = vmatprep.subr.bf16.mxu0 0
    %1280 = vmatpush2.bf16.msra.mxu0 0
    %1281 = vmatprep.subr.bf16.mxu0 0
    %1282 = vmatpush2.bf16.msra.mxu0 0
    %1283 = vmatprep.subr.bf16.mxu0 0
    %1284 = vmatpush2.bf16.msra.mxu0 0
    %1285 = vmatprep.subr.bf16.mxu0 0
    %1286 = vmatpush2.bf16.msra.mxu0 0
    %1287 = vmatprep.subr.bf16.mxu0 0
    %1288 = vmatpush2.bf16.msra.mxu0 0
    %1289 = vmatprep.subr.bf16.mxu0 0
    %1290 = vmatpush2.bf16.msra.mxu0 0
    %1291 = vmatprep.subr.bf16.mxu0 0
    %1292 = vmatpush2.bf16.msra.mxu0 0
    %1293 = vmatprep.mubr.bf16.mxu0 0
    %1294 = vmatmul.mubr.bf16.gmra.mxu0 %v1189
    %v1295 = vpop.f32.mrf.mxu0
    %v1296 = vadd.f32 %v1211, %v1295
    %v1297 = vpop.f32.mrf.mxu0
    %v1298 = vpop.f32.mrf.mxu0
    %v1299 = vpop.f32.mrf.mxu0
    %1300 = vdwg.mxu0
    %v1301 = vsel %vm718, %v1296, -inf
    %1302 = vmax.xlane.f32.xlu0 %v1301
    %v1303 = vpop.xlane.xlu0 %1302
    %v1304 = vsub.f32 %v1296, %v1303
    %v1305 = vmul.f32 %v1304, 1.442695
    %v1306 = vpow.pop %v1305
    %v1307 = vsel %vm718, %v1306, 0.0
    %1308 = vadd.xlane.f32.xlu0 %v1307
    %v1309 = vpop.xlane.xlu0 %1308
    %v1310 = vlog2.pop %v1309
    %v1311 = vmul.f32 %v1310, 0.6931472
    %v1312 = vsub.f32 %v1304, %v1311
    %1313 = vst.msk [vmem:[#allocation11] sm:$0xff] %vm718, %v1312
    // Predicated region
    $region58: #{tpu_custom_call.1} parent=1 // pred_check
      _
    $region59: #{tpu_custom_call.1} parent=1 // pred_check_branch
      %1315 = sbr.rel (0) target = $region61
    $region60: #{tpu_custom_call.1} parent=1 // pred_region
      %s1317 = ssub.s32 128, 128
      %1318 = vsyncadd [#allocation4], %s1317
      %s1320 = sshll.u32 [#allocation11], 4
      %s1321 = int_to_ptr.vmem [resolvable:$true] %s1320
      %1323 = dma.vmem_to_hbm [thread:$0]  %s1321, 128, %s9, [#allocation4]
    $region61: #{tpu_custom_call.1} parent=1 // pred_fallthru
      _
    // Predicated region
    $region62: #{tpu_custom_call.1} parent=1 // pred_check
      _
    $region63: #{tpu_custom_call.1} parent=1 // pred_check_branch
      %1325 = sbr.rel (0) target = $region65
    $region64: #{tpu_custom_call.1} parent=1 // pred_region
      %1326 = dma.done [#allocation4], 128
    $region65: #{tpu_custom_call.1} parent=1 // pred_fallthru
      _
    %1327 = vsyncpa [#allocation3], 1
    %1328 = vsyncpa [#allocation6], 1
    %1329 = vsyncpa [#allocation9], 1
    %1330 = vsyncpa [#allocation4], 1

</llo_original>
